<compile_context>
chip_gen: v6e
topology: v6e:2x2x1
jax: 0.10.0
libtpu: 0.0.40
codegen_flags: <defaults>
</compile_context>

<pallas_src>
import jax
import jax.numpy as jnp
from jax.experimental import pallas as pl
from jax.experimental.pallas import tpu as pltpu


def _make_kernel(w: int, dim: int, fuse_x: bool):
    per_slice = (dim % 128) == 0  # lane-aligned per-j stores possible

    def kernel(*refs):
        if fuse_x:
            wflat_ref, h_ref, x_ref, o_ref = refs
        else:
            wflat_ref, h_ref, o_ref = refs
            x_ref = None

        hp = h_ref[...]                                   # (block_h, dim)

        if per_slice:
            # Unrolled full-lane slice stores: no (block_h, w*dim) temp, no XLU.
            for j in range(w):
                sl = slice(j * dim, (j + 1) * dim)
                val = hp + wflat_ref[:, sl]               # broadcast over rows (VPU)
                if fuse_x:
                    val = val + x_ref[:, sl]
                o_ref[:, sl] = val.astype(o_ref.dtype)
        else:
            # dim not 128-aligned: single full-tile store is cheaper than
            # w masked partial stores.
            wp = wflat_ref[...]                           # (1, w*dim)
            hp_rep = jnp.tile(hp, (1, w))                 # (block_h, w*dim)
            val = hp_rep + wp
            if fuse_x:
                val = val + x_ref[...]
            o_ref[...] = val.astype(o_ref.dtype)

    return kernel


def _choose_block_h(h: int, row_bytes: int, itemsize: int, total_bytes: int,
                    budget_bytes: int = 4 << 20) -> int:
    """Pick a row-tile size.

    - dtype-aware sublane rounding (8 for f32, 16 for bf16, 32 for int8/fp8)
    - never requires block_h | h (partial last block handled by pl.cdiv)
    - forces >= 2 blocks for non-trivial outputs (both v7x TensorCores busy)
    - bounds one output tile to ~budget_bytes so default double-buffering fits
      every generation's scoped VMEM (incl. v7x's 64 MiB physical VMEM).
    """
    sub = max(8, 32 // max(itemsize, 1))      # sublane pack for this dtype
    if h <= sub:
        return h                              # full-extent block (always legal)

    bh_cap = h
    if total_bytes > (256 << 10):             # non-trivial output: split for v7x
        bh_cap = pl.cdiv(h, 2)

    bh_budget = max(budget_bytes // max(row_bytes, 1), 1)
    bh = min(bh_cap, bh_budget, h)
    bh = max((bh // sub) * sub, sub)          # round down to sublane multiple
    return bh


def learned_2d_positional_encoder(w_pos: jax.Array, h_pos: jax.Array,
                                  x: jax.Array | None = None,
                                  out_dtype=None) -> jax.Array:
    """w_pos: (w, dim), h_pos: (h, dim) -> (h*w, dim).

    If `x` (shape (h*w, dim)) is given, returns x + pos with the output
    aliased onto x's buffer (consumer-fusion path).  `out_dtype` lets a bf16
    consumer halve writeback bytes (stores narrow, the add stays f32 in-reg).
    """
    w, dim = w_pos.shape
    h, dim_h = h_pos.shape
    assert dim == dim_h, "w_pos / h_pos feature dims must match"
    if out_dtype is None:
        out_dtype = jnp.result_type(w_pos.dtype, h_pos.dtype)
    itemsize = jnp.dtype(out_dtype).itemsize

    lane_w = w * dim
    row_bytes = lane_w * itemsize
    total_bytes = h * row_bytes
    block_h = _choose_block_h(h, row_bytes, itemsize, total_bytes)
    grid = (pl.cdiv(h, block_h),)

    # Flatten w_pos once in the wrapper (tiny, one-time, outside the kernel).
    w_flat = w_pos.reshape(1, lane_w).astype(out_dtype)
    h_pos = h_pos.astype(out_dtype)

    fuse_x = x is not None
    in_specs = [
        pl.BlockSpec((1, lane_w), lambda i: (0, 0)),        # w_flat, resident
        pl.BlockSpec((block_h, dim), lambda i: (i, 0)),     # h_pos row tile
    ]
    args = [w_flat, h_pos]
    io_aliases = {}
    if fuse_x:
        assert x.shape == (h * w, dim), "x must be (h*w, dim)"
        # (h*w, dim) -> (h, w*dim) is byte-identical row-major.
        x2d = x.reshape(h, lane_w).astype(out_dtype)
        in_specs.append(pl.BlockSpec((block_h, lane_w), lambda i: (i, 0)))
        args.append(x2d)
        io_aliases = {2: 0}                                 # out aliases x2d

    out_2d = pl.pallas_call(
        _make_kernel(w, dim, fuse_x),
        out_shape=jax.ShapeDtypeStruct((h, lane_w), out_dtype),
        grid=grid,
        in_specs=in_specs,
        out_specs=pl.BlockSpec((block_h, lane_w), lambda i: (i, 0)),
        input_output_aliases=io_aliases,
        compiler_params=pltpu.CompilerParams(
            dimension_semantics=("parallel",),
        ),
    )(*args)

    # Row-major bytes of (h, w*dim) == (h*w, dim): this reshape is free.
    return out_2d.reshape(h * w, dim)


def trunc_normal_init(key, shape, std=0.02, dtype=jnp.float32):
    # matches timm trunc_normal_(std=0.02) closely enough for example inputs
    return (std * jax.random.truncated_normal(key, -2.0, 2.0, shape)).astype(dtype)


if __name__ == "__main__":
    key = jax.random.PRNGKey(0)
    kw, kh, kx = jax.random.split(key, 3)

    # --- Config 1: dim not a multiple of 128 (full-tile path) -----------------
    dim, w, h = 32, 8, 8
    w_pos = trunc_normal_init(kw, (w, dim))
    h_pos = trunc_normal_init(kh, (h, dim))

    out = jax.block_until_ready(learned_2d_positional_encoder(w_pos, h_pos))
    ref = (w_pos[None, :, :] + h_pos[:, None, :]).reshape(h * w, dim)
    assert out.shape == (h * w, dim)
    assert jnp.allclose(out, ref, atol=1e-6), "mismatch vs reference (standalone)"

    # Fused consumer path: out = x + pos, output aliased onto x's buffer.
    x = jax.random.normal(kx, (h * w, dim), dtype=jnp.float32)
    out_fused = jax.block_until_ready(
        learned_2d_positional_encoder(w_pos, h_pos, x=x))
    assert jnp.allclose(out_fused, x + ref, atol=1e-6), "mismatch vs reference (fused)"

    # --- Config 2: dim % 128 == 0 (per-j full-lane stores) + ragged h tiling ---
    dim2, w2, h2 = 128, 4, 20
    kw2, kh2 = jax.random.split(kh)
    w_pos2 = trunc_normal_init(kw2, (w2, dim2))
    h_pos2 = trunc_normal_init(kh2, (h2, dim2))

    out2 = jax.block_until_ready(learned_2d_positional_encoder(w_pos2, h_pos2))
    ref2 = (w_pos2[None, :, :] + h_pos2[:, None, :]).reshape(h2 * w2, dim2)
    assert jnp.allclose(out2, ref2, atol=1e-6), "mismatch vs reference (128-aligned)"

    print("KERNEL_OK")
</pallas_src>

<mosaic_0001>
module attributes {stable_mosaic.version = 11 : i64} {
  func.func @kernel(%arg0: i32, %arg1: memref<1x256xf32, #tpu.memory_space<vmem>>, %arg2: memref<8x32xf32, #tpu.memory_space<vmem>>, %arg3: memref<8x256xf32, #tpu.memory_space<vmem>>) attributes {dimension_semantics = [#tpu.dimension_semantics<parallel>], iteration_bounds = array<i64: 1>, scalar_prefetch = 0 : i64, scratch_operands = 0 : i64, tpu.core_type = #tpu.core_type<tc>, window_params = [{pipeline_mode = #tpu.pipeline_mode<synchronous>, transform_indices = @transform_0, window_bounds = array<i64: 1, 256>}, {transform_indices = @transform_1, window_bounds = array<i64: 8, 32>}, {transform_indices = @transform_2, window_bounds = array<i64: 8, 256>}]} {
    %c0 = arith.constant 0 : index
    %c0_0 = arith.constant 0 : index
    %0 = vector.load %arg2[%c0, %c0_0] : memref<8x32xf32, #tpu.memory_space<vmem>>, vector<8x32xf32>
    %c0_1 = arith.constant 0 : index
    %c0_2 = arith.constant 0 : index
    %1 = vector.load %arg1[%c0_1, %c0_2] : memref<1x256xf32, #tpu.memory_space<vmem>>, vector<1x256xf32>
    %2 = tpu.concatenate %0, %0, %0, %0, %0, %0, %0, %0 in 1 : vector<8x32xf32>, vector<8x32xf32>, vector<8x32xf32>, vector<8x32xf32>, vector<8x32xf32>, vector<8x32xf32>, vector<8x32xf32>, vector<8x32xf32> -> vector<8x256xf32>
    %3 = vector.broadcast %1 : vector<1x256xf32> to vector<8x256xf32>
    %4 = arith.addf %2, %3 : vector<8x256xf32>
    %c0_3 = arith.constant 0 : index
    %c0_4 = arith.constant 0 : index
    %5 = vector.load %arg3[%c0_3, %c0_4] : memref<8x256xf32, #tpu.memory_space<vmem>>, vector<8x256xf32>
    tpu.vector_store %arg3[%c0_3, %c0_4], %4 {strides = array<i32>} : memref<8x256xf32, #tpu.memory_space<vmem>>, vector<8x256xf32>,
    return
  }
  func.func @transform_0(%arg0: i32) -> (i32, i32) {
    %c0_i32 = arith.constant 0 : i32
    %c0_i32_0 = arith.constant 0 : i32
    %c0_i32_1 = arith.constant 0 : i32
    return %c0_i32, %c0_i32_0 : i32, i32
  }
  func.func @transform_1(%arg0: i32) -> (i32, i32) {
    %c0_i32 = arith.constant 0 : i32
    %c0_i32_0 = arith.constant 0 : i32
    return %arg0, %c0_i32 : i32, i32
  }
  func.func @transform_2(%arg0: i32) -> (i32, i32) {
    %c0_i32 = arith.constant 0 : i32
    %c0_i32_0 = arith.constant 0 : i32
    return %arg0, %c0_i32 : i32, i32
  }
}

</mosaic_0001>

<llo_original>
// kernel: tpu_custom_call.1
$region0: #{tpu_custom_call.1}
  #allocation0 [shape = 'u32[]', space=smem, size = 0x4, offset = 0x4, fixed_abs, tag = 'smem constant byte address 0x4 - core index']
  #allocation1 [shape = 'u32[144,128]{1,0:T(1,128)}', space=vmem, size = 0x12000, scoped, tag = 'internal scratch']
  %s0 = inlined_call_operand.hbm [shape: f32[1,256], index: 0, kind: input, shape index: {}]
  %s1 = inlined_call_operand.hbm [shape: f32[8,32], index: 1, kind: input, shape index: {}]
  %s2 = inlined_call_operand.hbm [shape: f32[8,256], index: 2, kind: output, shape index: {}]
  %s3 = sld [smem:[#allocation0]]
  $region26: #{tpu_custom_call.1} parent=0
    _
  %s5 = ssub.s32 1, %s3
  %s6 = scalar_select 0, %s5, %s3
  $region1: #{tpu_custom_call.1} parent=0
    #allocation2 [shape = 'u8[1024]{0}', space=vmem, size = 0x400, scoped, tag = 'input window, operand 0, single buffered']
    #allocation3 [shape = 's32[1]{0}', space=sflag, size = 0x4, scoped, tag = 'scoped memory for tpu_custom_call.1']
    #allocation4 [shape = 's32[1]{0}', space=sflag, size = 0x4, scoped, tag = 'scoped memory for tpu_custom_call.1']
    #allocation5 [shape = 'u8[4096]{0}', space=vmem, size = 0x1000, scoped, tag = 'input window, operand 1, single buffered']
    #allocation6 [shape = 's32[1]{0}', space=sflag, size = 0x4, scoped, tag = 'scoped memory for tpu_custom_call.1']
    #allocation7 [shape = 'u8[8192]{0}', space=vmem, size = 0x2000, scoped, tag = 'output window, operand 0, single buffered']
    %7 = vsyncpa [#allocation3], 0
    %8 = vsyncpa [#allocation6], 0
    %9 = vsyncpa [#allocation4], 0
    // Predicated region
    $region2: #{tpu_custom_call.1} parent=1 // pred_check
      _
    $region3: #{tpu_custom_call.1} parent=1 // pred_check_branch
      %11 = sbr.rel (0) target = $region5
    $region4: #{tpu_custom_call.1} parent=1 // pred_region
      %s13 = ssub.s32 32, 32
      %14 = vsyncadd [#allocation3], %s13
      %s16 = sshll.u32 [#allocation2], 4
      %s17 = int_to_ptr.vmem [resolvable:$true] %s16
      %19 = dma.hbm_to_vmem [thread:$0]  %s0, 32, %s17, [#allocation3]
    $region5: #{tpu_custom_call.1} parent=1 // pred_fallthru
      _
    // Predicated region
    $region6: #{tpu_custom_call.1} parent=1 // pred_check
      _
    $region7: #{tpu_custom_call.1} parent=1 // pred_check_branch
      %21 = sbr.rel (0) target = $region9
    $region8: #{tpu_custom_call.1} parent=1 // pred_region
      %s23 = ssub.s32 128, 128
      %24 = vsyncadd [#allocation6], %s23
      %s26 = sshll.u32 [#allocation5], 4
      %s27 = int_to_ptr.vmem [resolvable:$true] %s26
      %29 = dma.hbm_to_vmem [thread:$0]  %s1, 128, %s27, [#allocation6]
    $region9: #{tpu_custom_call.1} parent=1 // pred_fallthru
      _
    // Predicated region
    $region10: #{tpu_custom_call.1} parent=1 // pred_check
      _
    $region11: #{tpu_custom_call.1} parent=1 // pred_check_branch
      %31 = sbr.rel (0) target = $region13
    $region12: #{tpu_custom_call.1} parent=1 // pred_region
      %32 = dma.done [#allocation3], 32
    $region13: #{tpu_custom_call.1} parent=1 // pred_fallthru
      _
    // Predicated region
    $region14: #{tpu_custom_call.1} parent=1 // pred_check
      _
    $region15: #{tpu_custom_call.1} parent=1 // pred_check_branch
      %34 = sbr.rel (0) target = $region17
    $region16: #{tpu_custom_call.1} parent=1 // pred_region
      %35 = dma.done [#allocation6], 128
    $region17: #{tpu_custom_call.1} parent=1 // pred_fallthru
      _
    %v36 = vld [vmem:[#allocation5] sm:$0xff]
    %v37 = vld [vmem:[#allocation2] sm:$0x3]
    %39 = vrot.lane.b32.xlu0 %v36, 32
    %v40 = vpop.permute.xlu0 %39
    %42 = vrot.lane.b32.xlu0 %v36, 64
    %v43 = vpop.permute.xlu0 %42
    %45 = vrot.lane.b32.xlu0 %v36, 96
    %v46 = vpop.permute.xlu0 %45
    %vm48 = vcmask 261120
    %v49 = vsel %vm48, %v36, %v40
    %vm50 = vcmask 523264
    %v51 = vsel %vm50, %v49, %v43
    %vm52 = vcmask 785408
    %v53 = vsel %vm52, %v51, %v46
    %v55 = vlaneseq
    %v56 = vshrl.u32 %v55, 7
    %v57 = vsub.s32 0, %v56
    %v58 = vrot.slane %v37, %v57
    %v59 = vlaneseq
    %v60 = vshrl.u32 %v59, 7
    %v61 = vsub.s32 1, %v60
    %v62 = vrot.slane %v37, %v61
    %v65 = vadd.f32 %v53, %v58
    %v66 = vadd.f32 %v53, %v62
    %67 = vst [vmem:[#allocation7] sm:$0xff] %v65
    %68 = vst [vmem:[#allocation7 + $0x8] sm:$0xff] %v66
    // Predicated region
    $region18: #{tpu_custom_call.1} parent=1 // pred_check
      _
    $region19: #{tpu_custom_call.1} parent=1 // pred_check_branch
      %70 = sbr.rel (0) target = $region21
    $region20: #{tpu_custom_call.1} parent=1 // pred_region
      %s72 = ssub.s32 256, 256
      %73 = vsyncadd [#allocation4], %s72
      %s75 = sshll.u32 [#allocation7], 4
      %s76 = int_to_ptr.vmem [resolvable:$true] %s75
      %78 = dma.vmem_to_hbm [thread:$0]  %s76, 256, %s2, [#allocation4]
    $region21: #{tpu_custom_call.1} parent=1 // pred_fallthru
      _
    // Predicated region
    $region22: #{tpu_custom_call.1} parent=1 // pred_check
      _
    $region23: #{tpu_custom_call.1} parent=1 // pred_check_branch
      %80 = sbr.rel (0) target = $region25
    $region24: #{tpu_custom_call.1} parent=1 // pred_region
      %81 = dma.done [#allocation4], 256
    $region25: #{tpu_custom_call.1} parent=1 // pred_fallthru
      _
    %82 = vsyncpa [#allocation3], 1
    %83 = vsyncpa [#allocation6], 1
    %84 = vsyncpa [#allocation4], 1

</llo_original>
